<compile_context>
chip_gen: v5e
topology: v5e:2x2
jax: 0.10.0
libtpu: 0.0.40
codegen_flags: <defaults>
</compile_context>

<pallas_src>
import functools
import math

import jax
import jax.numpy as jnp
from jax import lax
from jax.experimental import pallas as pl
from jax.experimental.pallas import tpu as pltpu


_ONEHOT_MAX_V = 2048          # one-hot MXU gather only while 2*V flop/byte is cheap
_MAX_PREFETCH_TOKENS = 32768  # cap on ids scalar-prefetched into SMEM per call


def _round_up(x, m):
    return ((x + m - 1) // m) * m


def _choose_tile(n_tokens, max_tile):
    """Token tile: multiple of 8 (sublane), divides the padded token axis."""
    tile = min(max_tile, _round_up(n_tokens, 8))
    n_pad = _round_up(n_tokens, tile)
    return tile, n_pad // tile, n_pad


def _vmem_budget_bytes():
    """Conservative per-core VMEM budget (query hardware, fall back to v7x)."""
    cap = 64 << 20
    try:
        cap = int(getattr(pltpu.get_tpu_info(), "vmem_capacity_bytes", cap))
    except Exception:
        pass
    return max(16 << 20, min((cap * 3) // 4, 112 << 20))


def _compiler_params(semantics, need_bytes, budget):
    """Only raise the scoped-VMEM limit when the kernel actually needs it."""
    if need_bytes > (14 << 20):   # above the smallest default scoped limit (v5e)
        return pltpu.CompilerParams(
            dimension_semantics=semantics,
            vmem_limit_bytes=int(min(budget, need_bytes + (8 << 20))))
    return pltpu.CompilerParams(dimension_semantics=semantics)


def _run_chunked(fn, ids, max_tokens):
    """Chunk the flat id vector so SMEM-prefetched ids stay small."""
    n = ids.shape[0]
    if n <= max_tokens:
        return fn(ids)
    parts = [fn(ids[s:s + max_tokens]) for s in range(0, n, max_tokens)]
    return jnp.concatenate(parts, axis=0)


# --------------------------------------------------------------------------
# Path A: VMEM-resident table, one-hot MXU gather.
# --------------------------------------------------------------------------
def _onehot_kernel(ids_ref, emb_ref, out_ref, *, scale):
    # ids_ref: (tile_n, 1) int32 (VMEM)   emb_ref: (V, E) resident   out: (tile_n, E)
    tile_n = ids_ref.shape[0]
    vocab = emb_ref.shape[0]
    ids = ids_ref[...]                                           # (tile_n, 1)
    iota = lax.broadcasted_iota(jnp.int32, (tile_n, vocab), 1)   # (tile_n, V)
    onehot = (iota == ids).astype(emb_ref.dtype)                 # exact 0/1
    rows = jnp.dot(onehot, emb_ref[...], preferred_element_type=jnp.float32)
    out_ref[...] = (rows * scale).astype(out_ref.dtype)


def _embed_onehot(ids, emb, scale, budget, max_tile=256):
    (n,) = ids.shape
    V, E = emb.shape
    itemsize = jnp.dtype(emb.dtype).itemsize
    tile_n, n_tiles, n_pad = _choose_tile(n, max_tile)
    if n_pad != n:
        ids = jnp.pad(ids, (0, n_pad - n))      # padded rows gather id 0, sliced off
    ids2d = ids.reshape(n_pad, 1)

    need = (2 * V * E * itemsize                # resident table (double-buffered)
            + 2 * tile_n * E * itemsize         # output double buffer
            + tile_n * (V + E) * 4              # one-hot + f32 intermediates
            + 2 * tile_n * 4)                   # id blocks

    out = pl.pallas_call(
        functools.partial(_onehot_kernel, scale=scale),
        out_shape=jax.ShapeDtypeStruct((n_pad, E), emb.dtype),
        grid=(n_tiles,),
        in_specs=[
            pl.BlockSpec((tile_n, 1), lambda i: (i, 0)),   # ids tile
            pl.BlockSpec((V, E), lambda i: (0, 0)),        # table: constant -> resident
        ],
        out_specs=pl.BlockSpec((tile_n, E), lambda i: (i, 0)),
        compiler_params=_compiler_params(("parallel",), need, budget),
    )(ids2d, emb)
    return out[:n] if n_pad != n else out


# --------------------------------------------------------------------------
# Path B: VMEM-resident table, per-row VMEM dynamic-slice gather.
# --------------------------------------------------------------------------
def _vmem_gather_kernel(tok_ref, emb_ref, out_ref, *, scale, tile_n):
    # tok_ref: (N_pad,) int32 in SMEM (scalar prefetch)
    # emb_ref: (V, E) VMEM-resident table      out_ref: (tile_n, E)
    base = pl.program_id(0) * tile_n
    for r in range(tile_n):                       # static unroll: static stores,
        tok = tok_ref[base + r]                   # scalar work fully visible to LLO
        row = emb_ref[pl.ds(tok, 1), :].astype(jnp.float32)
        out_ref[pl.ds(r, 1), :] = (row * scale).astype(out_ref.dtype)


def _embed_vmem_gather(ids, emb, scale, budget, max_tile=128):
    (n,) = ids.shape
    V, E = emb.shape
    itemsize = jnp.dtype(emb.dtype).itemsize
    tile_n, n_tiles, n_pad = _choose_tile(n, max_tile)
    if n_pad != n:
        ids = jnp.pad(ids, (0, n_pad - n))

    need = 2 * V * E * itemsize + 2 * tile_n * E * itemsize + tile_n * E * 4

    out = pl.pallas_call(
        functools.partial(_vmem_gather_kernel, scale=scale, tile_n=tile_n),
        out_shape=jax.ShapeDtypeStruct((n_pad, E), emb.dtype),
        grid_spec=pltpu.PrefetchScalarGridSpec(
            num_scalar_prefetch=1,                          # ids -> SMEM
            grid=(n_tiles,),
            in_specs=[pl.BlockSpec((V, E), lambda i, tok: (0, 0))],  # resident table
            out_specs=pl.BlockSpec((tile_n, E), lambda i, tok: (i, 0)),
        ),
        compiler_params=_compiler_params(("parallel",), need, budget),
    )(ids, emb)
    return out[:n] if n_pad != n else out


# --------------------------------------------------------------------------
# Path C: table in HBM, double-buffered per-row DMA gather with cross-tile
#         prefetch and a single aggregate wait per tile.
# --------------------------------------------------------------------------
def _hbm_gather_kernel(tok_ref, emb_hbm, out_ref, buf, sems, *, scale, tile_n):
    # tok_ref: (N_pad,) int32 in SMEM   emb_hbm: (V, E) in HBM (pl.ANY)
    # out_ref: (tile_n, E)              buf: (2, tile_n, E)   sems: (2,) DMA
    i = pl.program_id(0)
    n_tiles = pl.num_programs(0)
    slot = lax.rem(i, 2)

    def issue_tile(tile_idx, slot_idx):
        base = tile_idx * tile_n

        def issue_row(r, carry):
            tok = tok_ref[base + r]
            pltpu.make_async_copy(
                emb_hbm.at[pl.ds(tok, 1)],          # (1, E) row in HBM
                buf.at[slot_idx, pl.ds(r, 1)],      # (1, E) row in VMEM
                sems.at[slot_idx],
            ).start()
            return carry

        # Partial unroll packs descriptor-build scalar work across iterations.
        lax.fori_loop(0, tile_n, issue_row, 0, unroll=8)

    # Prime the pipeline with the first tile.
    @pl.when(i == 0)
    def _():
        issue_tile(0, 0)

    # Prefetch next tile's rows into the other slot before waiting on this one.
    @pl.when(i + 1 < n_tiles)
    def _():
        issue_tile(i + 1, 1 - slot)

    # Single aggregate wait for the whole tile. Invariant: every started copy
    # is the same size (1, E) and targets sems[slot]; DMA semaphores count
    # bytes, so one (tile_n, E)-sized wait == tile_n per-row waits.
    pltpu.make_async_copy(
        emb_hbm.at[pl.ds(0, tile_n)],
        buf.at[slot],
        sems.at[slot],
    ).wait()

    rows = buf[slot].astype(jnp.float32)
    out_ref[...] = (rows * scale).astype(out_ref.dtype)


def _embed_hbm_gather(ids, emb, scale, budget, max_tile=512):
    (n,) = ids.shape
    V, E = emb.shape
    itemsize = jnp.dtype(emb.dtype).itemsize
    # Aggregate-wait descriptor spans tile_n table rows; keep it in bounds.
    max_tile = min(max_tile, max(8, (V // 8) * 8))
    tile_n, n_tiles, n_pad = _choose_tile(n, max_tile)
    if n_pad != n:
        ids = jnp.pad(ids, (0, n_pad - n))

    need = 2 * tile_n * E * itemsize + 2 * tile_n * E * itemsize + tile_n * E * 4

    out = pl.pallas_call(
        functools.partial(_hbm_gather_kernel, scale=scale, tile_n=tile_n),
        out_shape=jax.ShapeDtypeStruct((n_pad, E), emb.dtype),
        grid_spec=pltpu.PrefetchScalarGridSpec(
            num_scalar_prefetch=1,                          # ids -> SMEM
            grid=(n_tiles,),
            in_specs=[pl.BlockSpec(memory_space=pl.ANY)],   # table stays in HBM
            out_specs=pl.BlockSpec((tile_n, E), lambda i, tok: (i, 0)),
            scratch_shapes=[
                pltpu.VMEM((2, tile_n, E), emb.dtype),      # double-buffered landing
                pltpu.SemaphoreType.DMA((2,)),              # one sem per slot
            ],
        ),
        # Cross-tile prefetch makes consecutive grid steps dependent -> keep the
        # token axis a single sequential loop (no megacore split on this path).
        compiler_params=_compiler_params(("arbitrary",), need, budget),
    )(ids, emb)
    return out[:n] if n_pad != n else out


# --------------------------------------------------------------------------
# Public wrapper.
# --------------------------------------------------------------------------
def token_embedding(tokens, emb_table, *, impl=None):
    """tokens: int array (any shape); emb_table: (V, E) -> tokens.shape + (E,).

    Matches PyTorch TokenEmbedding: embedding(tokens.long()) * sqrt(emb_size).
    """
    V, E = emb_table.shape
    scale = math.sqrt(float(E))
    lead_shape = tokens.shape
    n = math.prod(lead_shape) if lead_shape else 1
    ids = jnp.clip(tokens.reshape((n,)).astype(jnp.int32), 0, V - 1)

    itemsize = jnp.dtype(emb_table.dtype).itemsize
    table_bytes = V * E * itemsize
    budget = _vmem_budget_bytes()

    if impl is None:
        fits_a = (V <= _ONEHOT_MAX_V
                  and 2 * table_bytes + 256 * (V + 2 * E) * 4 + (1 << 20) <= budget)
        fits_b = 2 * table_bytes + 128 * E * 12 + (1 << 20) <= budget
        impl = "onehot" if fits_a else ("vmem_gather" if fits_b else "hbm_gather")

    if impl == "onehot":
        out = _embed_onehot(ids, emb_table, scale, budget)
    elif impl == "vmem_gather":
        out = _run_chunked(
            lambda c: _embed_vmem_gather(c, emb_table, scale, budget),
            ids, _MAX_PREFETCH_TOKENS)
    elif impl == "hbm_gather":
        out = _run_chunked(
            lambda c: _embed_hbm_gather(c, emb_table, scale, budget),
            ids, _MAX_PREFETCH_TOKENS)
    else:
        raise ValueError(f"unknown impl: {impl!r}")

    return out.reshape(lead_shape + (E,))


if __name__ == "__main__":
    # Small deterministic setup consistent with the module:
    #   vocab_size=32, emb_size=128, tokens of shape (batch=2, seq=8).
    vocab_size, emb_size = 32, 128
    B, S = 2, 8

    key = jax.random.PRNGKey(0)
    k_emb, k_tok = jax.random.split(key)
    emb_table = jax.random.normal(k_emb, (vocab_size, emb_size), dtype=jnp.float32)
    tokens = jax.random.randint(k_tok, (B, S), 0, vocab_size, dtype=jnp.int32)

    # Natural path for this config: VMEM-resident table + one-hot MXU gather.
    out = token_embedding(tokens, emb_table)
    out = jax.block_until_ready(out)

    # Reference: embedding[tokens] * sqrt(emb_size)
    ref = jnp.take(emb_table, tokens, axis=0) * math.sqrt(float(emb_size))
    assert out.shape == (B, S, emb_size)
    assert out.dtype == emb_table.dtype
    assert jnp.allclose(out, ref, atol=1e-5, rtol=1e-5), \
        float(jnp.max(jnp.abs(out - ref)))

    print("KERNEL_OK")
</pallas_src>

<mosaic_0001>
module attributes {stable_mosaic.version = 11 : i64} {
  func.func @_onehot_kernel(%arg0: i32, %arg1: memref<16x1xi32, #tpu.memory_space<vmem>>, %arg2: memref<32x128xf32, #tpu.memory_space<vmem>>, %arg3: memref<16x128xf32, #tpu.memory_space<vmem>>) attributes {dimension_semantics = [#tpu.dimension_semantics<parallel>], iteration_bounds = array<i64: 1>, scalar_prefetch = 0 : i64, scratch_operands = 0 : i64, tpu.core_type = #tpu.core_type<tc>, window_params = [{transform_indices = @transform_0, window_bounds = array<i64: 16, 1>}, {pipeline_mode = #tpu.pipeline_mode<synchronous>, transform_indices = @transform_1, window_bounds = array<i64: 32, 128>}, {transform_indices = @transform_2, window_bounds = array<i64: 16, 128>}]} {
    %c0 = arith.constant 0 : index
    %c0_0 = arith.constant 0 : index
    %0 = vector.load %arg1[%c0, %c0_0] : memref<16x1xi32, #tpu.memory_space<vmem>>, vector<16x1xi32>
    %1 = tpu.iota {dimensions = array<i32: 1>} : vector<16x32xi32>
    %2 = vector.broadcast %0 : vector<16x1xi32> to vector<16x32xi32>
    %3 = arith.cmpi eq, %1, %2 : vector<16x32xi32>
    %4 = arith.extui %3 : vector<16x32xi1> to vector<16x32xi32>
    %5 = arith.sitofp %4 : vector<16x32xi32> to vector<16x32xf32>
    %c0_1 = arith.constant 0 : index
    %c0_2 = arith.constant 0 : index
    %6 = vector.load %arg2[%c0_1, %c0_2] : memref<32x128xf32, #tpu.memory_space<vmem>>, vector<32x128xf32>
    %cst = arith.constant dense<0.000000e+00> : vector<16x128xf32>
    %7 = tpu.matmul %5, %6, %cst {dimension_numbers = #tpu.dot_dimension_numbers<[1], [0], [0], [1], [0, 0, 1, 1], [], []>} : vector<16x32xf32>, vector<32x128xf32>, vector<16x128xf32> -> vector<16x128xf32>
    %cst_3 = arith.constant 11.3137083 : f32
    %8 = vector.broadcast %cst_3 : f32 to vector<16x128xf32>
    %9 = arith.mulf %7, %8 : vector<16x128xf32>
    %c0_4 = arith.constant 0 : index
    %c0_5 = arith.constant 0 : index
    %10 = vector.load %arg3[%c0_4, %c0_5] : memref<16x128xf32, #tpu.memory_space<vmem>>, vector<16x128xf32>
    tpu.vector_store %arg3[%c0_4, %c0_5], %9 {strides = array<i32>} : memref<16x128xf32, #tpu.memory_space<vmem>>, vector<16x128xf32>,
    return
  }
  func.func @transform_0(%arg0: i32) -> (i32, i32) {
    %c0_i32 = arith.constant 0 : i32
    %c0_i32_0 = arith.constant 0 : i32
    return %arg0, %c0_i32 : i32, i32
  }
  func.func @transform_1(%arg0: i32) -> (i32, i32) {
    %c0_i32 = arith.constant 0 : i32
    %c0_i32_0 = arith.constant 0 : i32
    %c0_i32_1 = arith.constant 0 : i32
    return %c0_i32, %c0_i32_0 : i32, i32
  }
  func.func @transform_2(%arg0: i32) -> (i32, i32) {
    %c0_i32 = arith.constant 0 : i32
    %c0_i32_0 = arith.constant 0 : i32
    return %arg0, %c0_i32 : i32, i32
  }
}

</mosaic_0001>

<llo_original>
// kernel: tpu_custom_call.1
$region0: #{tpu_custom_call.1}
  #allocation0 [shape = 'u32[]', space=smem, size = 0x4, offset = 0x4, fixed_abs, tag = 'smem constant byte address 0x4 - core index']
  #allocation1 [shape = 'u32[72,128]{1,0:T(1,128)}', space=vmem, size = 0x9000, scoped, tag = 'internal scratch']
  %s0 = inlined_call_operand.vmem [shape: s32[16,1], index: 0, kind: input, shape index: {}]
  %s1 = inlined_call_operand.hbm [shape: f32[32,128], index: 1, kind: input, shape index: {}]
  %s2 = inlined_call_operand.hbm [shape: f32[16,128], index: 2, kind: output, shape index: {}]
  %s3 = sld [smem:[#allocation0]]
  $region22: #{tpu_custom_call.1} parent=0
    _
  %s5 = ssub.s32 1, %s3
  %s6 = scalar_select 0, %s5, %s3
  $region1: #{tpu_custom_call.1} parent=0
    #allocation2 [shape = 'u8[16384]{0}', space=vmem, size = 0x4000, scoped, tag = 'input window, operand 1, single buffered']
    #allocation3 [shape = 's32[1]{0}', space=sflag, size = 0x4, scoped, tag = 'scoped memory for tpu_custom_call.1']
    #allocation4 [shape = 's32[1]{0}', space=sflag, size = 0x4, scoped, tag = 'scoped memory for tpu_custom_call.1']
    #allocation5 [shape = 'u8[8192]{0}', space=vmem, size = 0x2000, scoped, tag = 'output window, operand 0, single buffered']
    %7 = vsyncpa [#allocation3], 0
    %8 = vsyncpa [#allocation4], 0
    // Predicated region
    $region2: #{tpu_custom_call.1} parent=1 // pred_check
      _
    $region3: #{tpu_custom_call.1} parent=1 // pred_check_branch
      %10 = sbr.rel (0) target = $region5
    $region4: #{tpu_custom_call.1} parent=1 // pred_region
      _
    $region5: #{tpu_custom_call.1} parent=1 // pred_fallthru
      _
    // Predicated region
    $region6: #{tpu_custom_call.1} parent=1 // pred_check
      _
    $region7: #{tpu_custom_call.1} parent=1 // pred_check_branch
      %12 = sbr.rel (0) target = $region9
    $region8: #{tpu_custom_call.1} parent=1 // pred_region
      %14 = vsyncadd [#allocation3], 0
      %s15 = sshll.u32 %s1, 4
      %s16 = int_to_ptr.hbm [resolvable:$true] %s15
      %s17 = sshll.u32 [#allocation2], 4
      %s18 = int_to_ptr.vmem [resolvable:$true] %s17
      %23 = dma.hbm_to_vmem [thread:$0]  %s16, 512, %s18, [#allocation3], 128, 128, 8
    $region9: #{tpu_custom_call.1} parent=1 // pred_fallthru
      _
    // Predicated region
    $region10: #{tpu_custom_call.1} parent=1 // pred_check
      _
    $region11: #{tpu_custom_call.1} parent=1 // pred_check_branch
      %25 = sbr.rel (0) target = $region13
    $region12: #{tpu_custom_call.1} parent=1 // pred_region
      %27 = dma.done [#allocation3], 512
    $region13: #{tpu_custom_call.1} parent=1 // pred_fallthru
      _
    %v28 = vld [vmem:[%s0] sm:$0xff]
    %v29 = vld [vmem:[%s0 + $0x8] sm:$0xff]
    %v30 = vlaneseq
    %v31 = vand.u32 %v30, 127
    %32 = vset.pattern.permute.xlu0 0
    %33 = vperm.xlu0 %32, %v28
    %v34 = vpop.permute.xlu0 %33
    %35 = vset.pattern.permute.xlu0 0
    %36 = vperm.xlu0 %35, %v29
    %v37 = vpop.permute.xlu0 %36
    %vm38 = vcmp.eq.s32.totalorder %v31, %v34
    %vm39 = vcmp.eq.s32.totalorder %v31, %v37
    %v40 = vsel %vm38, 1, 0
    %v41 = vsel %vm39, 1, 0
    %v42 = vcvt.s32.f32 %v40
    %v43 = vcvt.s32.f32 %v41
    %v44 = vld [vmem:[#allocation2] sm:$0xff]
    %v45 = vld [vmem:[#allocation2 + $0x8] sm:$0xff]
    %v46 = vld [vmem:[#allocation2 + $0x10] sm:$0xff]
    %v47 = vld [vmem:[#allocation2 + $0x18] sm:$0xff]
    %vm48 = vcmask 261120
    %v50 = vsel %vm48, %v42, 0
    %v53 = vsel %vm48, %v43, 0
    %55 = vmatpush.msra.mxu0 0.0
    %56 = vmatpush.msra.mxu0 0.0
    %57 = vmatpush.msra.mxu0 0.0
    %58 = vmatpush.msra.mxu0 0.0
    %59 = vmatpush.msra.mxu0 0.0
    %60 = vmatpush.msra.mxu0 0.0
    %61 = vmatpush.msra.mxu0 0.0
    %62 = vmatpush.msra.mxu0 0.0
    %63 = vmatpush.msra.mxu0 0.0
    %64 = vmatpush.msra.mxu0 0.0
    %65 = vmatpush.msra.mxu0 0.0
    %66 = vmatpush.msra.mxu0 0.0
    %67 = vmatpush.msra.mxu0 %v47
    %68 = vmatpush.msra.mxu0 %v46
    %69 = vmatpush.msra.mxu0 %v45
    %70 = vmatpush.msra.mxu0 %v44
    %71 = vmatmul.f32.gmra.mxu0 %v50
    %v72 = vpop.f32.mrf.mxu0
    %v73 = vadd.f32 0.0, %v72
    %74 = vmatmul.f32.gmra.mxu0 %v53
    %v75 = vpop.f32.mrf.mxu0
    %v76 = vadd.f32 0.0, %v75
    %77 = vdwg.mxu0
    %v78 = vmul.f32 %v73, 11.313708
    %v79 = vmul.f32 %v76, 11.313708
    %80 = vst [vmem:[#allocation5] sm:$0xff] %v78
    %81 = vst [vmem:[#allocation5 + $0x8] sm:$0xff] %v79
    // Predicated region
    $region14: #{tpu_custom_call.1} parent=1 // pred_check
      _
    $region15: #{tpu_custom_call.1} parent=1 // pred_check_branch
      %83 = sbr.rel (0) target = $region17
    $region16: #{tpu_custom_call.1} parent=1 // pred_region
      %85 = vsyncadd [#allocation4], 0
      %s86 = sshll.u32 [#allocation5], 4
      %s87 = int_to_ptr.vmem [resolvable:$true] %s86
      %s88 = sshll.u32 %s2, 4
      %s89 = int_to_ptr.hbm [resolvable:$true] %s88
      %94 = dma.vmem_to_hbm [thread:$0]  %s87, 256, %s89, [#allocation4], 128, 128, 8
    $region17: #{tpu_custom_call.1} parent=1 // pred_fallthru
      _
    // Predicated region
    $region18: #{tpu_custom_call.1} parent=1 // pred_check
      _
    $region19: #{tpu_custom_call.1} parent=1 // pred_check_branch
      %96 = sbr.rel (0) target = $region21
    $region20: #{tpu_custom_call.1} parent=1 // pred_region
      %98 = dma.done [#allocation4], 256
    $region21: #{tpu_custom_call.1} parent=1 // pred_fallthru
      _
    %99 = vsyncpa [#allocation3], 1
    %100 = vsyncpa [#allocation4], 1

</llo_original>
